<compile_context>
chip_gen: v7x
topology: tpu7x:2x2x1
jax: 0.10.0
libtpu: 0.0.40
codegen_flags: <defaults>
</compile_context>

<pallas_src>
import functools

import jax
import jax.numpy as jnp
from jax.experimental import pallas as pl
from jax.experimental.pallas import tpu as pltpu


_VMEM_LIMIT_BYTES = 32 * 1024 * 1024  # explicit; safe on v5e/v6e/v7x
_DEFAULT_TILE = 512                   # adj tile: 512x512 bf16 = 512 KiB/buffer


def _round_up(x, m):
    return (x + m - 1) // m * m


# --------------------------------------------------------------------------
# Kernels
# --------------------------------------------------------------------------
def _gcl_kernel(adj_ref, h_ref, w_ref, b_ref, o_ref, acc_ref):
    """One GraphConvolutionnalLayer + ReLU, tiled over (row tiles, adj-col tiles).

    Accumulates (adj @ h) over the adjacency-column grid axis; the weight
    transform, bias add and ReLU happen once at the last reduction step.
    """
    k = pl.program_id(1)

    @pl.when(k == 0)
    def _init():
        acc_ref[...] = jnp.zeros_like(acc_ref)

    # O(N^2) matmul carries the (narrow) input feature width.
    acc_ref[...] += jnp.dot(adj_ref[...], h_ref[...],
                            preferred_element_type=jnp.float32)

    @pl.when(k == pl.num_programs(1) - 1)
    def _finalize():
        agg = acc_ref[...].astype(jnp.bfloat16)
        h = jnp.dot(agg, w_ref[...], preferred_element_type=jnp.float32)
        h = h + b_ref[...]
        o_ref[...] = jnp.maximum(h, 0.0).astype(o_ref.dtype)


def _gcl_head_kernel(adj_ref, h_ref,
                     gw_ref, gb_ref,
                     lw1_ref, lb1_ref, lw2_ref, lb2_ref, lw3_ref, lb3_ref,
                     o_ref, acc_ref):
    """4th GCN layer with the l1/l2/l3 + tanh head fused into its finalize."""
    k = pl.program_id(1)

    @pl.when(k == 0)
    def _init():
        acc_ref[...] = jnp.zeros_like(acc_ref)

    acc_ref[...] += jnp.dot(adj_ref[...], h_ref[...],
                            preferred_element_type=jnp.float32)

    @pl.when(k == pl.num_programs(1) - 1)
    def _finalize():
        def lin(h, w_ref, b_ref):
            return jnp.dot(h.astype(jnp.bfloat16), w_ref[...],
                           preferred_element_type=jnp.float32) + b_ref[...]

        h = jnp.maximum(lin(acc_ref[...], gw_ref, gb_ref), 0.0)  # gcl4 + relu
        h = lin(h, lw1_ref, lb1_ref)                             # l1
        # dropout(p=0.1, training=False) -> identity at inference
        h = jnp.maximum(h, 0.0)                                  # relu
        h = jnp.maximum(lin(h, lw2_ref, lb2_ref), 0.0)           # l2 + relu
        h = lin(h, lw3_ref, lb3_ref)                             # l3 (lane-padded)
        o_ref[...] = jnp.tanh(h).astype(o_ref.dtype)


# --------------------------------------------------------------------------
# pallas_call wrappers
# --------------------------------------------------------------------------
def _compiler_params():
    return pltpu.CompilerParams(
        dimension_semantics=("parallel", "arbitrary"),
        vmem_limit_bytes=_VMEM_LIMIT_BYTES,
    )


def _gcl_layer(adj, h, w, b, *, tm):
    np_, f_in = h.shape
    f_out = w.shape[1]
    grid = (np_ // tm, np_ // tm)
    return pl.pallas_call(
        _gcl_kernel,
        out_shape=jax.ShapeDtypeStruct((np_, f_out), jnp.bfloat16),
        grid_spec=pltpu.PrefetchScalarGridSpec(
            num_scalar_prefetch=0,
            grid=grid,
            in_specs=[
                pl.BlockSpec((tm, tm), lambda i, k: (i, k)),       # adj tile
                pl.BlockSpec((tm, f_in), lambda i, k: (k, 0)),     # h rows of k
                pl.BlockSpec((f_in, f_out), lambda i, k: (0, 0)),  # weight (inv.)
                pl.BlockSpec((1, f_out), lambda i, k: (0, 0)),     # bias  (inv.)
            ],
            out_specs=pl.BlockSpec((tm, f_out), lambda i, k: (i, 0)),
            scratch_shapes=[pltpu.VMEM((tm, f_in), jnp.float32)],
        ),
        compiler_params=_compiler_params(),
    )(adj, h, w, b)


def _gcl_head_layer(adj, h, gw, gb, lw1, lb1, lw2, lb2, lw3p, lb3p, *, tm):
    np_, f_in = h.shape
    out_pad = lw3p.shape[1]
    grid = (np_ // tm, np_ // tm)

    def inv(shape):
        return pl.BlockSpec(shape, lambda i, k: (0, 0))

    return pl.pallas_call(
        _gcl_head_kernel,
        out_shape=jax.ShapeDtypeStruct((np_, out_pad), jnp.float32),
        grid_spec=pltpu.PrefetchScalarGridSpec(
            num_scalar_prefetch=0,
            grid=grid,
            in_specs=[
                pl.BlockSpec((tm, tm), lambda i, k: (i, k)),    # adj tile
                pl.BlockSpec((tm, f_in), lambda i, k: (k, 0)),  # h rows of k
                inv(gw.shape), inv(gb.shape),                   # gcl4 params
                inv(lw1.shape), inv(lb1.shape),                 # l1
                inv(lw2.shape), inv(lb2.shape),                 # l2
                inv(lw3p.shape), inv(lb3p.shape),               # l3 (lane-padded)
            ],
            out_specs=pl.BlockSpec((tm, out_pad), lambda i, k: (i, 0)),
            scratch_shapes=[pltpu.VMEM((tm, f_in), jnp.float32)],
        ),
        compiler_params=_compiler_params(),
    )(adj, h, gw, gb, lw1, lb1, lw2, lb2, lw3p, lb3p)


# --------------------------------------------------------------------------
# Forward
# --------------------------------------------------------------------------
@functools.partial(jax.jit, static_argnames=("tile",))
def gcn_reg_forward(x, adj, params, *, tile=_DEFAULT_TILE):
    (gw1, gb1, gw2, gb2, gw3, gb3, gw4, gb4,
     lw1, lb1, lw2, lb2, lw3, lb3) = params

    n = x.shape[0]
    out_f = lw3.shape[1]

    # Pad node count to a sublane-aligned tile multiple (zero rows/cols of
    # adj contribute nothing to real rows; padded rows are sliced off).
    tm = min(tile, _round_up(n, 8))
    np_ = _round_up(n, tm)
    if np_ != n:
        x = jnp.pad(x, ((0, np_ - n), (0, 0)))
        adj = jnp.pad(adj, ((0, np_ - n), (0, np_ - n)))

    # MXU inputs in bf16; accumulation / bias / activations stay f32.
    x_bf = x.astype(jnp.bfloat16)
    adj_bf = adj.astype(jnp.bfloat16)

    def wcast(w):
        return w.astype(jnp.bfloat16)

    def bcast_(b):
        return jnp.asarray(b, jnp.float32).reshape(1, -1)

    # Lane-dense head output: pad out_features up to a multiple of 128.
    out_pad = max(_round_up(out_f, 128), 128)
    lw3p = jnp.zeros((lw3.shape[0], out_pad), jnp.bfloat16)
    lw3p = lw3p.at[:, :out_f].set(lw3.astype(jnp.bfloat16))
    lb3p = jnp.zeros((1, out_pad), jnp.float32)
    lb3p = lb3p.at[:, :out_f].set(jnp.asarray(lb3, jnp.float32).reshape(1, -1))

    h = _gcl_layer(adj_bf, x_bf, wcast(gw1), bcast_(gb1), tm=tm)
    h = _gcl_layer(adj_bf, h, wcast(gw2), bcast_(gb2), tm=tm)
    h = _gcl_layer(adj_bf, h, wcast(gw3), bcast_(gb3), tm=tm)
    out = _gcl_head_layer(adj_bf, h,
                          wcast(gw4), bcast_(gb4),
                          wcast(lw1), bcast_(lb1),
                          wcast(lw2), bcast_(lb2),
                          lw3p, lb3p, tm=tm)
    return out[:n, :out_f]


def gcn_reg_reference(x, adj, params):
    """Pure-JAX f32 reference of the PyTorch forward (inference mode)."""
    (gw1, gb1, gw2, gb2, gw3, gb3, gw4, gb4,
     lw1, lb1, lw2, lb2, lw3, lb3) = params

    def gcl(h, w, b):
        return adj @ (h @ w) + b

    h = jax.nn.relu(gcl(x, gw1, gb1))
    h = jax.nn.relu(gcl(h, gw2, gb2))
    h = jax.nn.relu(gcl(h, gw3, gb3))
    h = jax.nn.relu(gcl(h, gw4, gb4))
    h = h @ lw1 + lb1          # dropout(training=False) -> identity
    h = jax.nn.relu(h)
    h = jax.nn.relu(h @ lw2 + lb2)
    h = h @ lw3 + lb3
    return jnp.tanh(h)


def init_params(key, in_features, hidden_dim, out_features):
    """Deterministic synthetic parameters (no checkpoint load)."""
    dims = [
        (in_features, hidden_dim),        # gcl1
        (hidden_dim, hidden_dim),         # gcl2
        (hidden_dim, hidden_dim),         # gcl3
        (hidden_dim, hidden_dim),         # gcl4
        (hidden_dim, hidden_dim),         # l1
        (hidden_dim, hidden_dim // 2),    # l2
        (hidden_dim // 2, out_features),  # l3
    ]
    params = []
    for din, dout in dims:
        key, kw, kb = jax.random.split(key, 3)
        scale = 1.0 / jnp.sqrt(jnp.float32(din))
        w = jax.random.uniform(kw, (din, dout), jnp.float32, -scale, scale)
        b = jax.random.uniform(kb, (1, dout), jnp.float32, -scale, scale)
        params += [w, b]
    return tuple(params)


if __name__ == "__main__":
    # Small shapes: N=8 graph nodes, in_features=16, hidden_dim=32, out=4.
    N, IN_F, HID, OUT_F = 8, 16, 32, 4

    key = jax.random.PRNGKey(0)
    k_x, k_adj, k_p = jax.random.split(key, 3)

    x = jax.random.normal(k_x, (N, IN_F), jnp.float32)

    # Symmetric, self-looped, row-normalized adjacency matrix.
    a = (jax.random.uniform(k_adj, (N, N)) < 0.4).astype(jnp.float32)
    a = jnp.maximum(a, a.T) + jnp.eye(N, dtype=jnp.float32)
    adj = a / jnp.sum(a, axis=1, keepdims=True)

    params = init_params(k_p, IN_F, HID, OUT_F)

    out = gcn_reg_forward(x, adj, params)
    out = jax.block_until_ready(out)

    ref = gcn_reg_reference(x, adj, params)

    assert out.shape == (N, OUT_F)
    assert bool(jnp.all(jnp.isfinite(out)))
    assert bool(jnp.all(jnp.abs(out) <= 1.0))  # tanh output range
    max_err = float(jnp.max(jnp.abs(out - ref)))
    assert max_err < 0.1, f"max abs error vs f32 reference: {max_err}"
    print("KERNEL_OK")
</pallas_src>

<mosaic_0001>
module attributes {stable_mosaic.version = 11 : i64} {
  func.func @_gcl_kernel(%arg0: i32, %arg1: i32, %arg2: memref<8x8xbf16, #tpu.memory_space<vmem>>, %arg3: memref<8x16xbf16, #tpu.memory_space<vmem>>, %arg4: memref<16x32xbf16, #tpu.memory_space<vmem>>, %arg5: memref<1x32xf32, #tpu.memory_space<vmem>>, %arg6: memref<8x32xbf16, #tpu.memory_space<vmem>>, %arg7: memref<8x16xf32, #tpu.memory_space<vmem>>) attributes {dimension_semantics = [#tpu.dimension_semantics<parallel>, #tpu.dimension_semantics<arbitrary>], iteration_bounds = array<i64: 1, 1>, scalar_prefetch = 0 : i64, scratch_operands = 1 : i64, tpu.core_type = #tpu.core_type<tc>, window_params = [{transform_indices = @transform_0, window_bounds = array<i64: 8, 8>}, {transform_indices = @transform_1, window_bounds = array<i64: 8, 16>}, {pipeline_mode = #tpu.pipeline_mode<synchronous>, transform_indices = @transform_2, window_bounds = array<i64: 16, 32>}, {pipeline_mode = #tpu.pipeline_mode<synchronous>, transform_indices = @transform_3, window_bounds = array<i64: 1, 32>}, {transform_indices = @transform_4, window_bounds = array<i64: 8, 32>}]} {
    %c0_i32 = arith.constant 0 : i32
    %0 = arith.cmpi eq, %arg1, %c0_i32 : i32
    %1 = arith.extui %0 : i1 to i32
    %c0_i32_0 = arith.constant 0 : i32
    %2 = arith.cmpi ne, %1, %c0_i32_0 : i32
    scf.if %2 {
      %cst_10 = arith.constant 0.000000e+00 : f32
      %12 = vector.broadcast %cst_10 : f32 to vector<8x16xf32>
      %c0_11 = arith.constant 0 : index
      %c0_12 = arith.constant 0 : index
      %13 = vector.load %arg7[%c0_11, %c0_12] : memref<8x16xf32, #tpu.memory_space<vmem>>, vector<8x16xf32>
      tpu.vector_store %arg7[%c0_11, %c0_12], %12 {strides = array<i32>} : memref<8x16xf32, #tpu.memory_space<vmem>>, vector<8x16xf32>,
    } else {
    }
    %c0 = arith.constant 0 : index
    %c0_1 = arith.constant 0 : index
    %3 = vector.load %arg7[%c0, %c0_1] : memref<8x16xf32, #tpu.memory_space<vmem>>, vector<8x16xf32>
    %c0_2 = arith.constant 0 : index
    %c0_3 = arith.constant 0 : index
    %4 = vector.load %arg2[%c0_2, %c0_3] : memref<8x8xbf16, #tpu.memory_space<vmem>>, vector<8x8xbf16>
    %c0_4 = arith.constant 0 : index
    %c0_5 = arith.constant 0 : index
    %5 = vector.load %arg3[%c0_4, %c0_5] : memref<8x16xbf16, #tpu.memory_space<vmem>>, vector<8x16xbf16>
    %cst = arith.constant dense<0.000000e+00> : vector<8x16xf32>
    %6 = tpu.matmul %4, %5, %cst {dimension_numbers = #tpu.dot_dimension_numbers<[1], [0], [0], [1], [0, 0, 1, 1], [], []>} : vector<8x8xbf16>, vector<8x16xbf16>, vector<8x16xf32> -> vector<8x16xf32>
    %7 = arith.addf %3, %6 : vector<8x16xf32>
    %c0_6 = arith.constant 0 : index
    %c0_7 = arith.constant 0 : index
    %8 = vector.load %arg7[%c0_6, %c0_7] : memref<8x16xf32, #tpu.memory_space<vmem>>, vector<8x16xf32>
    tpu.vector_store %arg7[%c0_6, %c0_7], %7 {strides = array<i32>} : memref<8x16xf32, #tpu.memory_space<vmem>>, vector<8x16xf32>,
    %c0_i32_8 = arith.constant 0 : i32
    %9 = arith.cmpi eq, %arg1, %c0_i32_8 : i32
    %10 = arith.extui %9 : i1 to i32
    %c0_i32_9 = arith.constant 0 : i32
    %11 = arith.cmpi ne, %10, %c0_i32_9 : i32
    scf.if %11 {
      %c0_10 = arith.constant 0 : index
      %c0_11 = arith.constant 0 : index
      %12 = vector.load %arg7[%c0_10, %c0_11] : memref<8x16xf32, #tpu.memory_space<vmem>>, vector<8x16xf32>
      %13 = arith.truncf %12 : vector<8x16xf32> to vector<8x16xbf16>
      %c0_12 = arith.constant 0 : index
      %c0_13 = arith.constant 0 : index
      %14 = vector.load %arg4[%c0_12, %c0_13] : memref<16x32xbf16, #tpu.memory_space<vmem>>, vector<16x32xbf16>
      %cst_14 = arith.constant dense<0.000000e+00> : vector<8x32xf32>
      %15 = tpu.matmul %13, %14, %cst_14 {dimension_numbers = #tpu.dot_dimension_numbers<[1], [0], [0], [1], [0, 0, 1, 1], [], []>} : vector<8x16xbf16>, vector<16x32xbf16>, vector<8x32xf32> -> vector<8x32xf32>
      %c0_15 = arith.constant 0 : index
      %c0_16 = arith.constant 0 : index
      %16 = vector.load %arg5[%c0_15, %c0_16] : memref<1x32xf32, #tpu.memory_space<vmem>>, vector<1x32xf32>
      %17 = vector.broadcast %16 : vector<1x32xf32> to vector<8x32xf32>
      %18 = arith.addf %15, %17 : vector<8x32xf32>
      %cst_17 = arith.constant 0.000000e+00 : f32
      %19 = vector.broadcast %cst_17 : f32 to vector<8x32xf32>
      %20 = arith.maximumf %18, %19 : vector<8x32xf32>
      %21 = arith.truncf %20 : vector<8x32xf32> to vector<8x32xbf16>
      %c0_18 = arith.constant 0 : index
      %c0_19 = arith.constant 0 : index
      %22 = vector.load %arg6[%c0_18, %c0_19] : memref<8x32xbf16, #tpu.memory_space<vmem>>, vector<8x32xbf16>
      tpu.vector_store %arg6[%c0_18, %c0_19], %21 {strides = array<i32>} : memref<8x32xbf16, #tpu.memory_space<vmem>>, vector<8x32xbf16>,
    } else {
    }
    return
  }
  func.func @transform_0(%arg0: i32, %arg1: i32) -> (i32, i32) {
    %c0_i32 = arith.constant 0 : i32
    return %arg0, %arg1 : i32, i32
  }
  func.func @transform_1(%arg0: i32, %arg1: i32) -> (i32, i32) {
    %c0_i32 = arith.constant 0 : i32
    %c0_i32_0 = arith.constant 0 : i32
    return %arg1, %c0_i32 : i32, i32
  }
  func.func @transform_2(%arg0: i32, %arg1: i32) -> (i32, i32) {
    %c0_i32 = arith.constant 0 : i32
    %c0_i32_0 = arith.constant 0 : i32
    %c0_i32_1 = arith.constant 0 : i32
    return %c0_i32, %c0_i32_0 : i32, i32
  }
  func.func @transform_3(%arg0: i32, %arg1: i32) -> (i32, i32) {
    %c0_i32 = arith.constant 0 : i32
    %c0_i32_0 = arith.constant 0 : i32
    %c0_i32_1 = arith.constant 0 : i32
    return %c0_i32, %c0_i32_0 : i32, i32
  }
  func.func @transform_4(%arg0: i32, %arg1: i32) -> (i32, i32) {
    %c0_i32 = arith.constant 0 : i32
    %c0_i32_0 = arith.constant 0 : i32
    return %arg0, %c0_i32 : i32, i32
  }
}

module attributes {stable_mosaic.version = 11 : i64} {
  func.func @_gcl_head_kernel(%arg0: i32, %arg1: i32, %arg2: memref<8x8xbf16, #tpu.memory_space<vmem>>, %arg3: memref<8x32xbf16, #tpu.memory_space<vmem>>, %arg4: memref<32x32xbf16, #tpu.memory_space<vmem>>, %arg5: memref<1x32xf32, #tpu.memory_space<vmem>>, %arg6: memref<32x32xbf16, #tpu.memory_space<vmem>>, %arg7: memref<1x32xf32, #tpu.memory_space<vmem>>, %arg8: memref<32x16xbf16, #tpu.memory_space<vmem>>, %arg9: memref<1x16xf32, #tpu.memory_space<vmem>>, %arg10: memref<16x128xbf16, #tpu.memory_space<vmem>>, %arg11: memref<1x128xf32, #tpu.memory_space<vmem>>, %arg12: memref<8x128xf32, #tpu.memory_space<vmem>>, %arg13: memref<8x32xf32, #tpu.memory_space<vmem>>) attributes {dimension_semantics = [#tpu.dimension_semantics<parallel>, #tpu.dimension_semantics<arbitrary>], iteration_bounds = array<i64: 1, 1>, scalar_prefetch = 0 : i64, scratch_operands = 1 : i64, tpu.core_type = #tpu.core_type<tc>, window_params = [{transform_indices = @transform_0, window_bounds = array<i64: 8, 8>}, {transform_indices = @transform_1, window_bounds = array<i64: 8, 32>}, {pipeline_mode = #tpu.pipeline_mode<synchronous>, transform_indices = @transform_2, window_bounds = array<i64: 32, 32>}, {pipeline_mode = #tpu.pipeline_mode<synchronous>, transform_indices = @transform_3, window_bounds = array<i64: 1, 32>}, {pipeline_mode = #tpu.pipeline_mode<synchronous>, transform_indices = @transform_4, window_bounds = array<i64: 32, 32>}, {pipeline_mode = #tpu.pipeline_mode<synchronous>, transform_indices = @transform_5, window_bounds = array<i64: 1, 32>}, {pipeline_mode = #tpu.pipeline_mode<synchronous>, transform_indices = @transform_6, window_bounds = array<i64: 32, 16>}, {pipeline_mode = #tpu.pipeline_mode<synchronous>, transform_indices = @transform_7, window_bounds = array<i64: 1, 16>}, {pipeline_mode = #tpu.pipeline_mode<synchronous>, transform_indices = @transform_8, window_bounds = array<i64: 16, 128>}, {pipeline_mode = #tpu.pipeline_mode<synchronous>, transform_indices = @transform_9, window_bounds = array<i64: 1, 128>}, {transform_indices = @transform_10, window_bounds = array<i64: 8, 128>}]} {
    %c0_i32 = arith.constant 0 : i32
    %0 = arith.cmpi eq, %arg1, %c0_i32 : i32
    %1 = arith.extui %0 : i1 to i32
    %c0_i32_0 = arith.constant 0 : i32
    %2 = arith.cmpi ne, %1, %c0_i32_0 : i32
    scf.if %2 {
      %cst_10 = arith.constant 0.000000e+00 : f32
      %12 = vector.broadcast %cst_10 : f32 to vector<8x32xf32>
      %c0_11 = arith.constant 0 : index
      %c0_12 = arith.constant 0 : index
      %13 = vector.load %arg13[%c0_11, %c0_12] : memref<8x32xf32, #tpu.memory_space<vmem>>, vector<8x32xf32>
      tpu.vector_store %arg13[%c0_11, %c0_12], %12 {strides = array<i32>} : memref<8x32xf32, #tpu.memory_space<vmem>>, vector<8x32xf32>,
    } else {
    }
    %c0 = arith.constant 0 : index
    %c0_1 = arith.constant 0 : index
    %3 = vector.load %arg13[%c0, %c0_1] : memref<8x32xf32, #tpu.memory_space<vmem>>, vector<8x32xf32>
    %c0_2 = arith.constant 0 : index
    %c0_3 = arith.constant 0 : index
    %4 = vector.load %arg2[%c0_2, %c0_3] : memref<8x8xbf16, #tpu.memory_space<vmem>>, vector<8x8xbf16>
    %c0_4 = arith.constant 0 : index
    %c0_5 = arith.constant 0 : index
    %5 = vector.load %arg3[%c0_4, %c0_5] : memref<8x32xbf16, #tpu.memory_space<vmem>>, vector<8x32xbf16>
    %cst = arith.constant dense<0.000000e+00> : vector<8x32xf32>
    %6 = tpu.matmul %4, %5, %cst {dimension_numbers = #tpu.dot_dimension_numbers<[1], [0], [0], [1], [0, 0, 1, 1], [], []>} : vector<8x8xbf16>, vector<8x32xbf16>, vector<8x32xf32> -> vector<8x32xf32>
    %7 = arith.addf %3, %6 : vector<8x32xf32>
    %c0_6 = arith.constant 0 : index
    %c0_7 = arith.constant 0 : index
    %8 = vector.load %arg13[%c0_6, %c0_7] : memref<8x32xf32, #tpu.memory_space<vmem>>, vector<8x32xf32>
    tpu.vector_store %arg13[%c0_6, %c0_7], %7 {strides = array<i32>} : memref<8x32xf32, #tpu.memory_space<vmem>>, vector<8x32xf32>,
    %c0_i32_8 = arith.constant 0 : i32
    %9 = arith.cmpi eq, %arg1, %c0_i32_8 : i32
    %10 = arith.extui %9 : i1 to i32
    %c0_i32_9 = arith.constant 0 : i32
    %11 = arith.cmpi ne, %10, %c0_i32_9 : i32
    scf.if %11 {
      %c0_10 = arith.constant 0 : index
      %c0_11 = arith.constant 0 : index
      %12 = vector.load %arg13[%c0_10, %c0_11] : memref<8x32xf32, #tpu.memory_space<vmem>>, vector<8x32xf32>
      %13 = arith.truncf %12 : vector<8x32xf32> to vector<8x32xbf16>
      %c0_12 = arith.constant 0 : index
      %c0_13 = arith.constant 0 : index
      %14 = vector.load %arg4[%c0_12, %c0_13] : memref<32x32xbf16, #tpu.memory_space<vmem>>, vector<32x32xbf16>
      %cst_14 = arith.constant dense<0.000000e+00> : vector<8x32xf32>
      %15 = tpu.matmul %13, %14, %cst_14 {dimension_numbers = #tpu.dot_dimension_numbers<[1], [0], [0], [1], [0, 0, 1, 1], [], []>} : vector<8x32xbf16>, vector<32x32xbf16>, vector<8x32xf32> -> vector<8x32xf32>
      %c0_15 = arith.constant 0 : index
      %c0_16 = arith.constant 0 : index
      %16 = vector.load %arg5[%c0_15, %c0_16] : memref<1x32xf32, #tpu.memory_space<vmem>>, vector<1x32xf32>
      %17 = vector.broadcast %16 : vector<1x32xf32> to vector<8x32xf32>
      %18 = arith.addf %15, %17 : vector<8x32xf32>
      %cst_17 = arith.constant 0.000000e+00 : f32
      %19 = vector.broadcast %cst_17 : f32 to vector<8x32xf32>
      %20 = arith.maximumf %18, %19 : vector<8x32xf32>
      %21 = arith.truncf %20 : vector<8x32xf32> to vector<8x32xbf16>
      %c0_18 = arith.constant 0 : index
      %c0_19 = arith.constant 0 : index
      %22 = vector.load %arg6[%c0_18, %c0_19] : memref<32x32xbf16, #tpu.memory_space<vmem>>, vector<32x32xbf16>
      %cst_20 = arith.constant dense<0.000000e+00> : vector<8x32xf32>
      %23 = tpu.matmul %21, %22, %cst_20 {dimension_numbers = #tpu.dot_dimension_numbers<[1], [0], [0], [1], [0, 0, 1, 1], [], []>} : vector<8x32xbf16>, vector<32x32xbf16>, vector<8x32xf32> -> vector<8x32xf32>
      %c0_21 = arith.constant 0 : index
      %c0_22 = arith.constant 0 : index
      %24 = vector.load %arg7[%c0_21, %c0_22] : memref<1x32xf32, #tpu.memory_space<vmem>>, vector<1x32xf32>
      %25 = vector.broadcast %24 : vector<1x32xf32> to vector<8x32xf32>
      %26 = arith.addf %23, %25 : vector<8x32xf32>
      %cst_23 = arith.constant 0.000000e+00 : f32
      %27 = vector.broadcast %cst_23 : f32 to vector<8x32xf32>
      %28 = arith.maximumf %26, %27 : vector<8x32xf32>
      %29 = arith.truncf %28 : vector<8x32xf32> to vector<8x32xbf16>
      %c0_24 = arith.constant 0 : index
      %c0_25 = arith.constant 0 : index
      %30 = vector.load %arg8[%c0_24, %c0_25] : memref<32x16xbf16, #tpu.memory_space<vmem>>, vector<32x16xbf16>
      %cst_26 = arith.constant dense<0.000000e+00> : vector<8x16xf32>
      %31 = tpu.matmul %29, %30, %cst_26 {dimension_numbers = #tpu.dot_dimension_numbers<[1], [0], [0], [1], [0, 0, 1, 1], [], []>} : vector<8x32xbf16>, vector<32x16xbf16>, vector<8x16xf32> -> vector<8x16xf32>
      %c0_27 = arith.constant 0 : index
      %c0_28 = arith.constant 0 : index
      %32 = vector.load %arg9[%c0_27, %c0_28] : memref<1x16xf32, #tpu.memory_space<vmem>>, vector<1x16xf32>
      %33 = vector.broadcast %32 : vector<1x16xf32> to vector<8x16xf32>
      %34 = arith.addf %31, %33 : vector<8x16xf32>
      %cst_29 = arith.constant 0.000000e+00 : f32
      %35 = vector.broadcast %cst_29 : f32 to vector<8x16xf32>
      %36 = arith.maximumf %34, %35 : vector<8x16xf32>
      %37 = arith.truncf %36 : vector<8x16xf32> to vector<8x16xbf16>
      %c0_30 = arith.constant 0 : index
      %c0_31 = arith.constant 0 : index
      %38 = vector.load %arg10[%c0_30, %c0_31] : memref<16x128xbf16, #tpu.memory_space<vmem>>, vector<16x128xbf16>
      %cst_32 = arith.constant dense<0.000000e+00> : vector<8x128xf32>
      %39 = tpu.matmul %37, %38, %cst_32 {dimension_numbers = #tpu.dot_dimension_numbers<[1], [0], [0], [1], [0, 0, 1, 1], [], []>} : vector<8x16xbf16>, vector<16x128xbf16>, vector<8x128xf32> -> vector<8x128xf32>
      %c0_33 = arith.constant 0 : index
      %c0_34 = arith.constant 0 : index
      %40 = vector.load %arg11[%c0_33, %c0_34] : memref<1x128xf32, #tpu.memory_space<vmem>>, vector<1x128xf32>
      %41 = vector.broadcast %40 : vector<1x128xf32> to vector<8x128xf32>
      %42 = arith.addf %39, %41 : vector<8x128xf32>
      %43 = math.tanh %42 : vector<8x128xf32>
      %c0_35 = arith.constant 0 : index
      %c0_36 = arith.constant 0 : index
      %44 = vector.load %arg12[%c0_35, %c0_36] : memref<8x128xf32, #tpu.memory_space<vmem>>, vector<8x128xf32>
      tpu.vector_store %arg12[%c0_35, %c0_36], %43 {strides = array<i32>} : memref<8x128xf32, #tpu.memory_space<vmem>>, vector<8x128xf32>,
    } else {
    }
    return
  }
  func.func @transform_0(%arg0: i32, %arg1: i32) -> (i32, i32) {
    %c0_i32 = arith.constant 0 : i32
    return %arg0, %arg1 : i32, i32
  }
  func.func @transform_1(%arg0: i32, %arg1: i32) -> (i32, i32) {
    %c0_i32 = arith.constant 0 : i32
    %c0_i32_0 = arith.constant 0 : i32
    return %arg1, %c0_i32 : i32, i32
  }
  func.func @transform_2(%arg0: i32, %arg1: i32) -> (i32, i32) {
    %c0_i32 = arith.constant 0 : i32
    %c0_i32_0 = arith.constant 0 : i32
    %c0_i32_1 = arith.constant 0 : i32
    return %c0_i32, %c0_i32_0 : i32, i32
  }
  func.func @transform_3(%arg0: i32, %arg1: i32) -> (i32, i32) {
    %c0_i32 = arith.constant 0 : i32
    %c0_i32_0 = arith.constant 0 : i32
    %c0_i32_1 = arith.constant 0 : i32
    return %c0_i32, %c0_i32_0 : i32, i32
  }
  func.func @transform_4(%arg0: i32, %arg1: i32) -> (i32, i32) {
    %c0_i32 = arith.constant 0 : i32
    %c0_i32_0 = arith.constant 0 : i32
    %c0_i32_1 = arith.constant 0 : i32
    return %c0_i32, %c0_i32_0 : i32, i32
  }
  func.func @transform_5(%arg0: i32, %arg1: i32) -> (i32, i32) {
    %c0_i32 = arith.constant 0 : i32
    %c0_i32_0 = arith.constant 0 : i32
    %c0_i32_1 = arith.constant 0 : i32
    return %c0_i32, %c0_i32_0 : i32, i32
  }
  func.func @transform_6(%arg0: i32, %arg1: i32) -> (i32, i32) {
    %c0_i32 = arith.constant 0 : i32
    %c0_i32_0 = arith.constant 0 : i32
    %c0_i32_1 = arith.constant 0 : i32
    return %c0_i32, %c0_i32_0 : i32, i32
  }
  func.func @transform_7(%arg0: i32, %arg1: i32) -> (i32, i32) {
    %c0_i32 = arith.constant 0 : i32
    %c0_i32_0 = arith.constant 0 : i32
    %c0_i32_1 = arith.constant 0 : i32
    return %c0_i32, %c0_i32_0 : i32, i32
  }
  func.func @transform_8(%arg0: i32, %arg1: i32) -> (i32, i32) {
    %c0_i32 = arith.constant 0 : i32
    %c0_i32_0 = arith.constant 0 : i32
    %c0_i32_1 = arith.constant 0 : i32
    return %c0_i32, %c0_i32_0 : i32, i32
  }
  func.func @transform_9(%arg0: i32, %arg1: i32) -> (i32, i32) {
    %c0_i32 = arith.constant 0 : i32
    %c0_i32_0 = arith.constant 0 : i32
    %c0_i32_1 = arith.constant 0 : i32
    return %c0_i32, %c0_i32_0 : i32, i32
  }
  func.func @transform_10(%arg0: i32, %arg1: i32) -> (i32, i32) {
    %c0_i32 = arith.constant 0 : i32
    %c0_i32_0 = arith.constant 0 : i32
    return %arg0, %c0_i32 : i32, i32
  }
}

module attributes {stable_mosaic.version = 11 : i64} {
  func.func @_gcl_kernel(%arg0: i32, %arg1: i32, %arg2: memref<8x8xbf16, #tpu.memory_space<vmem>>, %arg3: memref<8x32xbf16, #tpu.memory_space<vmem>>, %arg4: memref<32x32xbf16, #tpu.memory_space<vmem>>, %arg5: memref<1x32xf32, #tpu.memory_space<vmem>>, %arg6: memref<8x32xbf16, #tpu.memory_space<vmem>>, %arg7: memref<8x32xf32, #tpu.memory_space<vmem>>) attributes {dimension_semantics = [#tpu.dimension_semantics<parallel>, #tpu.dimension_semantics<arbitrary>], iteration_bounds = array<i64: 1, 1>, scalar_prefetch = 0 : i64, scratch_operands = 1 : i64, tpu.core_type = #tpu.core_type<tc>, window_params = [{transform_indices = @transform_0, window_bounds = array<i64: 8, 8>}, {transform_indices = @transform_1, window_bounds = array<i64: 8, 32>}, {pipeline_mode = #tpu.pipeline_mode<synchronous>, transform_indices = @transform_2, window_bounds = array<i64: 32, 32>}, {pipeline_mode = #tpu.pipeline_mode<synchronous>, transform_indices = @transform_3, window_bounds = array<i64: 1, 32>}, {transform_indices = @transform_4, window_bounds = array<i64: 8, 32>}]} {
    %c0_i32 = arith.constant 0 : i32
    %0 = arith.cmpi eq, %arg1, %c0_i32 : i32
    %1 = arith.extui %0 : i1 to i32
    %c0_i32_0 = arith.constant 0 : i32
    %2 = arith.cmpi ne, %1, %c0_i32_0 : i32
    scf.if %2 {
      %cst_10 = arith.constant 0.000000e+00 : f32
      %12 = vector.broadcast %cst_10 : f32 to vector<8x32xf32>
      %c0_11 = arith.constant 0 : index
      %c0_12 = arith.constant 0 : index
      %13 = vector.load %arg7[%c0_11, %c0_12] : memref<8x32xf32, #tpu.memory_space<vmem>>, vector<8x32xf32>
      tpu.vector_store %arg7[%c0_11, %c0_12], %12 {strides = array<i32>} : memref<8x32xf32, #tpu.memory_space<vmem>>, vector<8x32xf32>,
    } else {
    }
    %c0 = arith.constant 0 : index
    %c0_1 = arith.constant 0 : index
    %3 = vector.load %arg7[%c0, %c0_1] : memref<8x32xf32, #tpu.memory_space<vmem>>, vector<8x32xf32>
    %c0_2 = arith.constant 0 : index
    %c0_3 = arith.constant 0 : index
    %4 = vector.load %arg2[%c0_2, %c0_3] : memref<8x8xbf16, #tpu.memory_space<vmem>>, vector<8x8xbf16>
    %c0_4 = arith.constant 0 : index
    %c0_5 = arith.constant 0 : index
    %5 = vector.load %arg3[%c0_4, %c0_5] : memref<8x32xbf16, #tpu.memory_space<vmem>>, vector<8x32xbf16>
    %cst = arith.constant dense<0.000000e+00> : vector<8x32xf32>
    %6 = tpu.matmul %4, %5, %cst {dimension_numbers = #tpu.dot_dimension_numbers<[1], [0], [0], [1], [0, 0, 1, 1], [], []>} : vector<8x8xbf16>, vector<8x32xbf16>, vector<8x32xf32> -> vector<8x32xf32>
    %7 = arith.addf %3, %6 : vector<8x32xf32>
    %c0_6 = arith.constant 0 : index
    %c0_7 = arith.constant 0 : index
    %8 = vector.load %arg7[%c0_6, %c0_7] : memref<8x32xf32, #tpu.memory_space<vmem>>, vector<8x32xf32>
    tpu.vector_store %arg7[%c0_6, %c0_7], %7 {strides = array<i32>} : memref<8x32xf32, #tpu.memory_space<vmem>>, vector<8x32xf32>,
    %c0_i32_8 = arith.constant 0 : i32
    %9 = arith.cmpi eq, %arg1, %c0_i32_8 : i32
    %10 = arith.extui %9 : i1 to i32
    %c0_i32_9 = arith.constant 0 : i32
    %11 = arith.cmpi ne, %10, %c0_i32_9 : i32
    scf.if %11 {
      %c0_10 = arith.constant 0 : index
      %c0_11 = arith.constant 0 : index
      %12 = vector.load %arg7[%c0_10, %c0_11] : memref<8x32xf32, #tpu.memory_space<vmem>>, vector<8x32xf32>
      %13 = arith.truncf %12 : vector<8x32xf32> to vector<8x32xbf16>
      %c0_12 = arith.constant 0 : index
      %c0_13 = arith.constant 0 : index
      %14 = vector.load %arg4[%c0_12, %c0_13] : memref<32x32xbf16, #tpu.memory_space<vmem>>, vector<32x32xbf16>
      %cst_14 = arith.constant dense<0.000000e+00> : vector<8x32xf32>
      %15 = tpu.matmul %13, %14, %cst_14 {dimension_numbers = #tpu.dot_dimension_numbers<[1], [0], [0], [1], [0, 0, 1, 1], [], []>} : vector<8x32xbf16>, vector<32x32xbf16>, vector<8x32xf32> -> vector<8x32xf32>
      %c0_15 = arith.constant 0 : index
      %c0_16 = arith.constant 0 : index
      %16 = vector.load %arg5[%c0_15, %c0_16] : memref<1x32xf32, #tpu.memory_space<vmem>>, vector<1x32xf32>
      %17 = vector.broadcast %16 : vector<1x32xf32> to vector<8x32xf32>
      %18 = arith.addf %15, %17 : vector<8x32xf32>
      %cst_17 = arith.constant 0.000000e+00 : f32
      %19 = vector.broadcast %cst_17 : f32 to vector<8x32xf32>
      %20 = arith.maximumf %18, %19 : vector<8x32xf32>
      %21 = arith.truncf %20 : vector<8x32xf32> to vector<8x32xbf16>
      %c0_18 = arith.constant 0 : index
      %c0_19 = arith.constant 0 : index
      %22 = vector.load %arg6[%c0_18, %c0_19] : memref<8x32xbf16, #tpu.memory_space<vmem>>, vector<8x32xbf16>
      tpu.vector_store %arg6[%c0_18, %c0_19], %21 {strides = array<i32>} : memref<8x32xbf16, #tpu.memory_space<vmem>>, vector<8x32xbf16>,
    } else {
    }
    return
  }
  func.func @transform_0(%arg0: i32, %arg1: i32) -> (i32, i32) {
    %c0_i32 = arith.constant 0 : i32
    return %arg0, %arg1 : i32, i32
  }
  func.func @transform_1(%arg0: i32, %arg1: i32) -> (i32, i32) {
    %c0_i32 = arith.constant 0 : i32
    %c0_i32_0 = arith.constant 0 : i32
    return %arg1, %c0_i32 : i32, i32
  }
  func.func @transform_2(%arg0: i32, %arg1: i32) -> (i32, i32) {
    %c0_i32 = arith.constant 0 : i32
    %c0_i32_0 = arith.constant 0 : i32
    %c0_i32_1 = arith.constant 0 : i32
    return %c0_i32, %c0_i32_0 : i32, i32
  }
  func.func @transform_3(%arg0: i32, %arg1: i32) -> (i32, i32) {
    %c0_i32 = arith.constant 0 : i32
    %c0_i32_0 = arith.constant 0 : i32
    %c0_i32_1 = arith.constant 0 : i32
    return %c0_i32, %c0_i32_0 : i32, i32
  }
  func.func @transform_4(%arg0: i32, %arg1: i32) -> (i32, i32) {
    %c0_i32 = arith.constant 0 : i32
    %c0_i32_0 = arith.constant 0 : i32
    return %arg0, %c0_i32 : i32, i32
  }
}

</mosaic_0001>

<llo_original>
// kernel: gcn_reg_forward.5
$region0: #{gcn_reg_forward.5}
  #allocation0 [shape = 'u32[]', space=smem, size = 0x4, offset = 0x4, fixed_abs, tag = 'smem constant byte address 0x4 - core index']
  #allocation1 [shape = 'u32[144,128]{1,0:T(1,128)}', space=vmem, size = 0x12000, scoped, tag = 'internal scratch']
  #allocation2 [shape = 'f32[8,32]{1,0:T(8,128)}', space=vmem, size = 0x1000, scoped, tag = 'scratch operand']
  %s0 = inlined_call_operand.vmem [shape: bf16[8,8], index: 0, kind: input, shape index: {}]
  %s1 = inlined_call_operand.vmem [shape: bf16[8,32], index: 1, kind: input, shape index: {}]
  %s2 = inlined_call_operand.vmem [shape: bf16[32,32], index: 2, kind: input, shape index: {}]
  %s3 = inlined_call_operand.vmem [shape: f32[1,32], index: 3, kind: input, shape index: {}]
  %s4 = inlined_call_operand.vmem [shape: bf16[8,32], index: 4, kind: output, shape index: {}]
  %s5 = sld [smem:[#allocation0]]
  $region34: #{gcn_reg_forward.5} parent=0
    _
  %s7 = ssub.s32 1, %s5
  %s8 = scalar_select 0, %s7, %s5
  // Predicated region
  $region2: #{gcn_reg_forward.5} parent=0 // pred_check
    _
  $region3: #{gcn_reg_forward.5} parent=0 // pred_check_branch
    %10 = sbr.rel (0) target = $region5
  $region4: #{gcn_reg_forward.5} parent=0 // pred_region
    _
  $region5: #{gcn_reg_forward.5} parent=0 // pred_fallthru
    _
  // Predicated region
  $region6: #{gcn_reg_forward.5} parent=0 // pred_check
    _
  $region7: #{gcn_reg_forward.5} parent=0 // pred_check_branch
    %12 = sbr.rel (0) target = $region9
  $region8: #{gcn_reg_forward.5} parent=0 // pred_region
    _
  $region9: #{gcn_reg_forward.5} parent=0 // pred_fallthru
    _
  // Predicated region
  $region10: #{gcn_reg_forward.5} parent=0 // pred_check
    _
  $region11: #{gcn_reg_forward.5} parent=0 // pred_check_branch
    %14 = sbr.rel (0) target = $region13
  $region12: #{gcn_reg_forward.5} parent=0 // pred_region
    _
  $region13: #{gcn_reg_forward.5} parent=0 // pred_fallthru
    _
  // Predicated region
  $region14: #{gcn_reg_forward.5} parent=0 // pred_check
    _
  $region15: #{gcn_reg_forward.5} parent=0 // pred_check_branch
    %16 = sbr.rel (0) target = $region17
  $region16: #{gcn_reg_forward.5} parent=0 // pred_region
    _
  $region17: #{gcn_reg_forward.5} parent=0 // pred_fallthru
    _
  %p18 = scmp.eq.s32.totalorder 0, 0
  // Predicated region
  $region18: #{gcn_reg_forward.5} parent=0 // pred_check
    %p19 = pneg %p18
  $region19: #{gcn_reg_forward.5} parent=0 // pred_check_branch
    %21 = sbr.rel (%p19) target = $region21
  $region20: #{gcn_reg_forward.5} parent=0 // pred_region
    %vm22 = vcmask 261120
    %23 = vst.msk [vmem:[#allocation2] sm:$0xff] %vm22, 0.0
  $region21: #{gcn_reg_forward.5} parent=0 // pred_fallthru
    _
  %v24 = vld [vmem:[#allocation2] sm:$0xff]
  %v25 = vld [vmem:[%s0] sm:$0xf]
  %v26 = vld [vmem:[%s1] sm:$0xf]
  %vm27 = vcmask 64512
  %v29 = vsel %vm27, %v25, 0
  %vm31 = vcmask 1043456
  %v33 = vsel %vm31, %v26, 0
  %35 = vmatprep.subr.bf16.mxu0 0
  %36 = vmatpush1.bf16.msra.mxu0 %v33
  %37 = vmatprep.subr.bf16.mxu0 0
  %38 = vmatpush1.bf16.msra.mxu0 0
  %39 = vmatprep.subr.bf16.mxu0 0
  %40 = vmatpush1.bf16.msra.mxu0 0
  %41 = vmatprep.subr.bf16.mxu0 0
  %42 = vmatpush1.bf16.msra.mxu0 0
  %43 = vmatprep.subr.bf16.mxu0 0
  %44 = vmatpush1.bf16.msra.mxu0 0
  %45 = vmatprep.subr.bf16.mxu0 0
  %46 = vmatpush1.bf16.msra.mxu0 0
  %47 = vmatprep.subr.bf16.mxu0 0
  %48 = vmatpush1.bf16.msra.mxu0 0
  %49 = vmatprep.subr.bf16.mxu0 0
  %50 = vmatpush1.bf16.msra.mxu0 0
  %51 = vmatprep.subr.bf16.mxu0 0
  %52 = vmatpush1.bf16.msra.mxu0 0
  %53 = vmatprep.subr.bf16.mxu0 0
  %54 = vmatpush1.bf16.msra.mxu0 0
  %55 = vmatprep.subr.bf16.mxu0 0
  %56 = vmatpush1.bf16.msra.mxu0 0
  %57 = vmatprep.subr.bf16.mxu0 0
  %58 = vmatpush1.bf16.msra.mxu0 0
  %59 = vmatprep.subr.bf16.mxu0 0
  %60 = vmatpush1.bf16.msra.mxu0 0
  %61 = vmatprep.subr.bf16.mxu0 0
  %62 = vmatpush1.bf16.msra.mxu0 0
  %63 = vmatprep.subr.bf16.mxu0 0
  %64 = vmatpush1.bf16.msra.mxu0 0
  %65 = vmatprep.subr.bf16.mxu0 0
  %66 = vmatpush1.bf16.msra.mxu0 0
  %67 = vmatprep.mubr.bf16.mxu0 0
  %68 = vmatmul.mubr.bf16.gmra.mrb[0].mxu0 %v29
  %v69 = vpop.f32.mrb[0].mxu0
  %v70 = vadd.f32 0.0, %v69
  %v71 = vpop.f32.mrb[0].mxu0
  %v72 = vpop.f32.mrb[0].mxu0
  %v73 = vpop.f32.mrb[0].mxu0
  %74 = vdwg.mxu0
  %v75 = vadd.f32 %v24, %v70
  %vm76 = vcmask 261120
  %77 = vst.msk [vmem:[#allocation2] sm:$0xff] %vm76, %v75
  // Predicated region
  $region22: #{gcn_reg_forward.5} parent=0 // pred_check
    %p78 = pneg %p18
  $region23: #{gcn_reg_forward.5} parent=0 // pred_check_branch
    %80 = sbr.rel (%p78) target = $region25
  $region24: #{gcn_reg_forward.5} parent=0 // pred_region
    %v81 = vld [vmem:[#allocation2] sm:$0xff]
    %v82 = vpack.c.bf16 %v81, %v81
    %v83 = vld [vmem:[%s2] sm:$0xf]
    %v84 = vld [vmem:[%s2 + $0x4] sm:$0xf]
    %v85 = vld [vmem:[%s2 + $0x8] sm:$0xf]
    %v86 = vld [vmem:[%s2 + $0xc] sm:$0xf]
    %v87 = vld [vmem:[%s3] sm:$0x1]
    %v89 = vlaneseq
    %v90 = vshrl.u32 %v89, 7
    %v91 = vsub.s32 0, %v90
    %v92 = vrot.slane %v87, %v91
    %v98 = vunpack.c.l.b16 %v83
    %v99 = vunpack.c.l.b16 %v84
    %v100 = vunpack.c.l.b16 %v85
    %v101 = vunpack.c.l.b16 %v86
    %v102 = vpack.c.b16 %v99, %v98
    %v103 = vpack.c.b16 %v101, %v100
    %v107 = vsel %vm76, %v82, 0
    %109 = vmatprep.subr.bf16.mxu0 0
    %110 = vmatpush1.bf16.msra.mxu0 %v102
    %111 = vmatprep.subr.bf16.mxu0 0
    %112 = vmatpush1.bf16.msra.mxu0 %v103
    %113 = vmatprep.subr.bf16.mxu0 0
    %114 = vmatpush1.bf16.msra.mxu0 0
    %115 = vmatprep.subr.bf16.mxu0 0
    %116 = vmatpush1.bf16.msra.mxu0 0
    %117 = vmatprep.subr.bf16.mxu0 0
    %118 = vmatpush1.bf16.msra.mxu0 0
    %119 = vmatprep.subr.bf16.mxu0 0
    %120 = vmatpush1.bf16.msra.mxu0 0
    %121 = vmatprep.subr.bf16.mxu0 0
    %122 = vmatpush1.bf16.msra.mxu0 0
    %123 = vmatprep.subr.bf16.mxu0 0
    %124 = vmatpush1.bf16.msra.mxu0 0
    %125 = vmatprep.subr.bf16.mxu0 0
    %126 = vmatpush1.bf16.msra.mxu0 0
    %127 = vmatprep.subr.bf16.mxu0 0
    %128 = vmatpush1.bf16.msra.mxu0 0
    %129 = vmatprep.subr.bf16.mxu0 0
    %130 = vmatpush1.bf16.msra.mxu0 0
    %131 = vmatprep.subr.bf16.mxu0 0
    %132 = vmatpush1.bf16.msra.mxu0 0
    %133 = vmatprep.subr.bf16.mxu0 0
    %134 = vmatpush1.bf16.msra.mxu0 0
    %135 = vmatprep.subr.bf16.mxu0 0
    %136 = vmatpush1.bf16.msra.mxu0 0
    %137 = vmatprep.subr.bf16.mxu0 0
    %138 = vmatpush1.bf16.msra.mxu0 0
    %139 = vmatprep.subr.bf16.mxu0 0
    %140 = vmatpush1.bf16.msra.mxu0 0
    %141 = vmatprep.mubr.bf16.mxu0 0
    %142 = vmatmul.mubr.bf16.gmra.mrb[0].mxu0 %v107
    %v143 = vpop.f32.mrb[0].mxu0
    %v144 = vadd.f32 %v92, %v143
    %v145 = vpop.f32.mrb[0].mxu0
    %v146 = vpop.f32.mrb[0].mxu0
    %v147 = vpop.f32.mrb[0].mxu0
    %148 = vdwg.mxu0
    %v149 = vmax.f32 %v144, 0.0
    %v150 = vpack.c.bf16 %v149, %v149
    %vm151 = vcmask 257024
    %152 = vst.msk [vmem:[%s4] sm:$0xf] %vm151, %v150
  $region25: #{gcn_reg_forward.5} parent=0 // pred_fallthru
    _
  // Predicated region
  $region26: #{gcn_reg_forward.5} parent=0 // pred_check
    _
  $region27: #{gcn_reg_forward.5} parent=0 // pred_check_branch
    %154 = sbr.rel (0) target = $region29
  $region28: #{gcn_reg_forward.5} parent=0 // pred_region
    _
  $region29: #{gcn_reg_forward.5} parent=0 // pred_fallthru
    _
  // Predicated region
  $region30: #{gcn_reg_forward.5} parent=0 // pred_check
    _
  $region31: #{gcn_reg_forward.5} parent=0 // pred_check_branch
    %156 = sbr.rel (0) target = $region33
  $region32: #{gcn_reg_forward.5} parent=0 // pred_region
    _
  $region33: #{gcn_reg_forward.5} parent=0 // pred_fallthru
    _

// kernel: gcn_reg_forward.4
$region0: #{gcn_reg_forward.4}
  #allocation0 [shape = 'u32[]', space=smem, size = 0x4, offset = 0x4, fixed_abs, tag = 'smem constant byte address 0x4 - core index']
  #allocation1 [shape = 'u32[144,128]{1,0:T(1,128)}', space=vmem, size = 0x12000, scoped, tag = 'internal scratch']
  #allocation2 [shape = 'f32[8,16]{1,0:T(8,128)}', space=vmem, size = 0x1000, scoped, tag = 'scratch operand']
  %s0 = inlined_call_operand.vmem [shape: bf16[8,8], index: 0, kind: input, shape index: {}]
  %s1 = inlined_call_operand.vmem [shape: bf16[8,16], index: 1, kind: input, shape index: {}]
  %s2 = inlined_call_operand.vmem [shape: bf16[16,32], index: 2, kind: input, shape index: {}]
  %s3 = inlined_call_operand.vmem [shape: f32[1,32], index: 3, kind: input, shape index: {}]
  %s4 = inlined_call_operand.vmem [shape: bf16[8,32], index: 4, kind: output, shape index: {}]
  %s5 = sld [smem:[#allocation0]]
  $region34: #{gcn_reg_forward.4} parent=0
    _
  %s7 = ssub.s32 1, %s5
  %s8 = scalar_select 0, %s7, %s5
  // Predicated region
  $region2: #{gcn_reg_forward.4} parent=0 // pred_check
    _
  $region3: #{gcn_reg_forward.4} parent=0 // pred_check_branch
    %10 = sbr.rel (0) target = $region5
  $region4: #{gcn_reg_forward.4} parent=0 // pred_region
    _
  $region5: #{gcn_reg_forward.4} parent=0 // pred_fallthru
    _
  // Predicated region
  $region6: #{gcn_reg_forward.4} parent=0 // pred_check
    _
  $region7: #{gcn_reg_forward.4} parent=0 // pred_check_branch
    %12 = sbr.rel (0) target = $region9
  $region8: #{gcn_reg_forward.4} parent=0 // pred_region
    _
  $region9: #{gcn_reg_forward.4} parent=0 // pred_fallthru
    _
  // Predicated region
  $region10: #{gcn_reg_forward.4} parent=0 // pred_check
    _
  $region11: #{gcn_reg_forward.4} parent=0 // pred_check_branch
    %14 = sbr.rel (0) target = $region13
  $region12: #{gcn_reg_forward.4} parent=0 // pred_region
    _
  $region13: #{gcn_reg_forward.4} parent=0 // pred_fallthru
    _
  // Predicated region
  $region14: #{gcn_reg_forward.4} parent=0 // pred_check
    _
  $region15: #{gcn_reg_forward.4} parent=0 // pred_check_branch
    %16 = sbr.rel (0) target = $region17
  $region16: #{gcn_reg_forward.4} parent=0 // pred_region
    _
  $region17: #{gcn_reg_forward.4} parent=0 // pred_fallthru
    _
  %p18 = scmp.eq.s32.totalorder 0, 0
  // Predicated region
  $region18: #{gcn_reg_forward.4} parent=0 // pred_check
    %p19 = pneg %p18
  $region19: #{gcn_reg_forward.4} parent=0 // pred_check_branch
    %21 = sbr.rel (%p19) target = $region21
  $region20: #{gcn_reg_forward.4} parent=0 // pred_region
    %vm22 = vcmask 130048
    %23 = vst.msk [vmem:[#allocation2] sm:$0xff] %vm22, 0.0
  $region21: #{gcn_reg_forward.4} parent=0 // pred_fallthru
    _
  %v24 = vld [vmem:[#allocation2] sm:$0xff]
  %v25 = vld [vmem:[%s0] sm:$0xf]
  %v26 = vld [vmem:[%s1] sm:$0xf]
  %vm27 = vcmask 64512
  %v29 = vsel %vm27, %v25, 0
  %vm31 = vcmask 1043456
  %v33 = vsel %vm31, %v26, 0
  %35 = vmatprep.subr.bf16.mxu0 0
  %36 = vmatpush1.bf16.msra.mxu0 %v33
  %37 = vmatprep.subr.bf16.mxu0 0
  %38 = vmatpush1.bf16.msra.mxu0 0
  %39 = vmatprep.subr.bf16.mxu0 0
  %40 = vmatpush1.bf16.msra.mxu0 0
  %41 = vmatprep.subr.bf16.mxu0 0
  %42 = vmatpush1.bf16.msra.mxu0 0
  %43 = vmatprep.subr.bf16.mxu0 0
  %44 = vmatpush1.bf16.msra.mxu0 0
  %45 = vmatprep.subr.bf16.mxu0 0
  %46 = vmatpush1.bf16.msra.mxu0 0
  %47 = vmatprep.subr.bf16.mxu0 0
  %48 = vmatpush1.bf16.msra.mxu0 0
  %49 = vmatprep.subr.bf16.mxu0 0
  %50 = vmatpush1.bf16.msra.mxu0 0
  %51 = vmatprep.subr.bf16.mxu0 0
  %52 = vmatpush1.bf16.msra.mxu0 0
  %53 = vmatprep.subr.bf16.mxu0 0
  %54 = vmatpush1.bf16.msra.mxu0 0
  %55 = vmatprep.subr.bf16.mxu0 0
  %56 = vmatpush1.bf16.msra.mxu0 0
  %57 = vmatprep.subr.bf16.mxu0 0
  %58 = vmatpush1.bf16.msra.mxu0 0
  %59 = vmatprep.subr.bf16.mxu0 0
  %60 = vmatpush1.bf16.msra.mxu0 0
  %61 = vmatprep.subr.bf16.mxu0 0
  %62 = vmatpush1.bf16.msra.mxu0 0
  %63 = vmatprep.subr.bf16.mxu0 0
  %64 = vmatpush1.bf16.msra.mxu0 0
  %65 = vmatprep.subr.bf16.mxu0 0
  %66 = vmatpush1.bf16.msra.mxu0 0
  %67 = vmatprep.mubr.bf16.mxu0 0
  %68 = vmatmul.mubr.bf16.gmra.mrb[0].mxu0 %v29
  %v69 = vpop.f32.mrb[0].mxu0
  %v70 = vadd.f32 0.0, %v69
  %v71 = vpop.f32.mrb[0].mxu0
  %v72 = vpop.f32.mrb[0].mxu0
  %v73 = vpop.f32.mrb[0].mxu0
  %74 = vdwg.mxu0
  %v75 = vadd.f32 %v24, %v70
  %vm76 = vcmask 130048
  %77 = vst.msk [vmem:[#allocation2] sm:$0xff] %vm76, %v75
  // Predicated region
  $region22: #{gcn_reg_forward.4} parent=0 // pred_check
    %p78 = pneg %p18
  $region23: #{gcn_reg_forward.4} parent=0 // pred_check_branch
    %80 = sbr.rel (%p78) target = $region25
  $region24: #{gcn_reg_forward.4} parent=0 // pred_region
    %v81 = vld [vmem:[#allocation2] sm:$0xff]
    %v82 = vpack.c.bf16 %v81, %v81
    %v83 = vld [vmem:[%s2] sm:$0xf]
    %v84 = vld [vmem:[%s2 + $0x4] sm:$0xf]
    %v85 = vld [vmem:[%s3] sm:$0x1]
    %v87 = vlaneseq
    %v88 = vshrl.u32 %v87, 7
    %v89 = vsub.s32 0, %v88
    %v90 = vrot.slane %v85, %v89
    %v94 = vunpack.c.l.b16 %v83
    %v95 = vunpack.c.l.b16 %v84
    %v96 = vpack.c.b16 %v95, %v94
    %v99 = vsel %vm76, %v82, 0
    %101 = vmatprep.subr.bf16.mxu0 0
    %102 = vmatpush1.bf16.msra.mxu0 %v96
    %103 = vmatprep.subr.bf16.mxu0 0
    %104 = vmatpush1.bf16.msra.mxu0 0
    %105 = vmatprep.subr.bf16.mxu0 0
    %106 = vmatpush1.bf16.msra.mxu0 0
    %107 = vmatprep.subr.bf16.mxu0 0
    %108 = vmatpush1.bf16.msra.mxu0 0
    %109 = vmatprep.subr.bf16.mxu0 0
    %110 = vmatpush1.bf16.msra.mxu0 0
    %111 = vmatprep.subr.bf16.mxu0 0
    %112 = vmatpush1.bf16.msra.mxu0 0
    %113 = vmatprep.subr.bf16.mxu0 0
    %114 = vmatpush1.bf16.msra.mxu0 0
    %115 = vmatprep.subr.bf16.mxu0 0
    %116 = vmatpush1.bf16.msra.mxu0 0
    %117 = vmatprep.subr.bf16.mxu0 0
    %118 = vmatpush1.bf16.msra.mxu0 0
    %119 = vmatprep.subr.bf16.mxu0 0
    %120 = vmatpush1.bf16.msra.mxu0 0
    %121 = vmatprep.subr.bf16.mxu0 0
    %122 = vmatpush1.bf16.msra.mxu0 0
    %123 = vmatprep.subr.bf16.mxu0 0
    %124 = vmatpush1.bf16.msra.mxu0 0
    %125 = vmatprep.subr.bf16.mxu0 0
    %126 = vmatpush1.bf16.msra.mxu0 0
    %127 = vmatprep.subr.bf16.mxu0 0
    %128 = vmatpush1.bf16.msra.mxu0 0
    %129 = vmatprep.subr.bf16.mxu0 0
    %130 = vmatpush1.bf16.msra.mxu0 0
    %131 = vmatprep.subr.bf16.mxu0 0
    %132 = vmatpush1.bf16.msra.mxu0 0
    %133 = vmatprep.mubr.bf16.mxu0 0
    %134 = vmatmul.mubr.bf16.gmra.mrb[0].mxu0 %v99
    %v135 = vpop.f32.mrb[0].mxu0
    %v136 = vadd.f32 %v90, %v135
    %v137 = vpop.f32.mrb[0].mxu0
    %v138 = vpop.f32.mrb[0].mxu0
    %v139 = vpop.f32.mrb[0].mxu0
    %140 = vdwg.mxu0
    %v141 = vmax.f32 %v136, 0.0
    %v142 = vpack.c.bf16 %v141, %v141
    %vm143 = vcmask 257024
    %144 = vst.msk [vmem:[%s4] sm:$0xf] %vm143, %v142
  $region25: #{gcn_reg_forward.4} parent=0 // pred_fallthru
    _
  // Predicated region
  $region26: #{gcn_reg_forward.4} parent=0 // pred_check
    _
  $region27: #{gcn_reg_forward.4} parent=0 // pred_check_branch
    %146 = sbr.rel (0) target = $region29
  $region28: #{gcn_reg_forward.4} parent=0 // pred_region
    _
  $region29: #{gcn_reg_forward.4} parent=0 // pred_fallthru
    _
  // Predicated region
  $region30: #{gcn_reg_forward.4} parent=0 // pred_check
    _
  $region31: #{gcn_reg_forward.4} parent=0 // pred_check_branch
    %148 = sbr.rel (0) target = $region33
  $region32: #{gcn_reg_forward.4} parent=0 // pred_region
    _
  $region33: #{gcn_reg_forward.4} parent=0 // pred_fallthru
    _

// kernel: gcn_reg_forward.7
$region0: #{gcn_reg_forward.7}
  #allocation0 [shape = 'u32[]', space=smem, size = 0x4, offset = 0x4, fixed_abs, tag = 'smem constant byte address 0x4 - core index']
  #allocation1 [shape = 'u32[144,128]{1,0:T(1,128)}', space=vmem, size = 0x12000, scoped, tag = 'internal scratch']
  #allocation2 [shape = 'f32[8,32]{1,0:T(8,128)}', space=vmem, size = 0x1000, scoped, tag = 'scratch operand']
  %s0 = inlined_call_operand.vmem [shape: bf16[8,8], index: 0, kind: input, shape index: {}]
  %s1 = inlined_call_operand.vmem [shape: bf16[8,32], index: 1, kind: input, shape index: {}]
  %s2 = inlined_call_operand.vmem [shape: bf16[32,32], index: 2, kind: input, shape index: {}]
  %s3 = inlined_call_operand.vmem [shape: f32[1,32], index: 3, kind: input, shape index: {}]
  %s4 = inlined_call_operand.vmem [shape: bf16[32,32], index: 4, kind: input, shape index: {}]
  %s5 = inlined_call_operand.vmem [shape: f32[1,32], index: 5, kind: input, shape index: {}]
  %s6 = inlined_call_operand.vmem [shape: bf16[32,16], index: 6, kind: input, shape index: {}]
  %s7 = inlined_call_operand.vmem [shape: f32[1,16], index: 7, kind: input, shape index: {}]
  %s8 = inlined_call_operand.vmem [shape: bf16[16,128], index: 8, kind: input, shape index: {}]
  %s9 = inlined_call_operand.vmem [shape: f32[1,128], index: 9, kind: input, shape index: {}]
  %s10 = inlined_call_operand.vmem [shape: f32[8,128], index: 10, kind: output, shape index: {}]
  %s11 = sld [smem:[#allocation0]]
  $region58: #{gcn_reg_forward.7} parent=0
    _
  %s13 = ssub.s32 1, %s11
  %s14 = scalar_select 0, %s13, %s11
  // Predicated region
  $region2: #{gcn_reg_forward.7} parent=0 // pred_check
    _
  $region3: #{gcn_reg_forward.7} parent=0 // pred_check_branch
    %16 = sbr.rel (0) target = $region5
  $region4: #{gcn_reg_forward.7} parent=0 // pred_region
    _
  $region5: #{gcn_reg_forward.7} parent=0 // pred_fallthru
    _
  // Predicated region
  $region6: #{gcn_reg_forward.7} parent=0 // pred_check
    _
  $region7: #{gcn_reg_forward.7} parent=0 // pred_check_branch
    %18 = sbr.rel (0) target = $region9
  $region8: #{gcn_reg_forward.7} parent=0 // pred_region
    _
  $region9: #{gcn_reg_forward.7} parent=0 // pred_fallthru
    _
  // Predicated region
  $region10: #{gcn_reg_forward.7} parent=0 // pred_check
    _
  $region11: #{gcn_reg_forward.7} parent=0 // pred_check_branch
    %20 = sbr.rel (0) target = $region13
  $region12: #{gcn_reg_forward.7} parent=0 // pred_region
    _
  $region13: #{gcn_reg_forward.7} parent=0 // pred_fallthru
    _
  // Predicated region
  $region14: #{gcn_reg_forward.7} parent=0 // pred_check
    _
  $region15: #{gcn_reg_forward.7} parent=0 // pred_check_branch
    %22 = sbr.rel (0) target = $region17
  $region16: #{gcn_reg_forward.7} parent=0 // pred_region
    _
  $region17: #{gcn_reg_forward.7} parent=0 // pred_fallthru
    _
  // Predicated region
  $region18: #{gcn_reg_forward.7} parent=0 // pred_check
    _
  $region19: #{gcn_reg_forward.7} parent=0 // pred_check_branch
    %24 = sbr.rel (0) target = $region21
  $region20: #{gcn_reg_forward.7} parent=0 // pred_region
    _
  $region21: #{gcn_reg_forward.7} parent=0 // pred_fallthru
    _
  // Predicated region
  $region22: #{gcn_reg_forward.7} parent=0 // pred_check
    _
  $region23: #{gcn_reg_forward.7} parent=0 // pred_check_branch
    %26 = sbr.rel (0) target = $region25
  $region24: #{gcn_reg_forward.7} parent=0 // pred_region
    _
  $region25: #{gcn_reg_forward.7} parent=0 // pred_fallthru
    _
  // Predicated region
  $region26: #{gcn_reg_forward.7} parent=0 // pred_check
    _
  $region27: #{gcn_reg_forward.7} parent=0 // pred_check_branch
    %28 = sbr.rel (0) target = $region29
  $region28: #{gcn_reg_forward.7} parent=0 // pred_region
    _
  $region29: #{gcn_reg_forward.7} parent=0 // pred_fallthru
    _
  // Predicated region
  $region30: #{gcn_reg_forward.7} parent=0 // pred_check
    _
  $region31: #{gcn_reg_forward.7} parent=0 // pred_check_branch
    %30 = sbr.rel (0) target = $region33
  $region32: #{gcn_reg_forward.7} parent=0 // pred_region
    _
  $region33: #{gcn_reg_forward.7} parent=0 // pred_fallthru
    _
  // Predicated region
  $region34: #{gcn_reg_forward.7} parent=0 // pred_check
    _
  $region35: #{gcn_reg_forward.7} parent=0 // pred_check_branch
    %32 = sbr.rel (0) target = $region37
  $region36: #{gcn_reg_forward.7} parent=0 // pred_region
    _
  $region37: #{gcn_reg_forward.7} parent=0 // pred_fallthru
    _
  // Predicated region
  $region38: #{gcn_reg_forward.7} parent=0 // pred_check
    _
  $region39: #{gcn_reg_forward.7} parent=0 // pred_check_branch
    %34 = sbr.rel (0) target = $region41
  $region40: #{gcn_reg_forward.7} parent=0 // pred_region
    _
  $region41: #{gcn_reg_forward.7} parent=0 // pred_fallthru
    _
  %p36 = scmp.eq.s32.totalorder 0, 0
  // Predicated region
  $region42: #{gcn_reg_forward.7} parent=0 // pred_check
    %p37 = pneg %p36
  $region43: #{gcn_reg_forward.7} parent=0 // pred_check_branch
    %39 = sbr.rel (%p37) target = $region45
  $region44: #{gcn_reg_forward.7} parent=0 // pred_region
    %vm40 = vcmask 261120
    %41 = vst.msk [vmem:[#allocation2] sm:$0xff] %vm40, 0.0
  $region45: #{gcn_reg_forward.7} parent=0 // pred_fallthru
    _
  %v42 = vld [vmem:[#allocation2] sm:$0xff]
  %v43 = vld [vmem:[%s0] sm:$0xf]
  %v44 = vld [vmem:[%s1] sm:$0xf]
  %vm45 = vcmask 64512
  %v47 = vsel %vm45, %v43, 0
  %vm49 = vcmask 1043456
  %v51 = vsel %vm49, %v44, 0
  %53 = vmatprep.subr.bf16.mxu0 0
  %54 = vmatpush1.bf16.msra.mxu0 %v51
  %55 = vmatprep.subr.bf16.mxu0 0
  %56 = vmatpush1.bf16.msra.mxu0 0
  %57 = vmatprep.subr.bf16.mxu0 0
  %58 = vmatpush1.bf16.msra.mxu0 0
  %59 = vmatprep.subr.bf16.mxu0 0
  %60 = vmatpush1.bf16.msra.mxu0 0
  %61 = vmatprep.subr.bf16.mxu0 0
  %62 = vmatpush1.bf16.msra.mxu0 0
  %63 = vmatprep.subr.bf16.mxu0 0
  %64 = vmatpush1.bf16.msra.mxu0 0
  %65 = vmatprep.subr.bf16.mxu0 0
  %66 = vmatpush1.bf16.msra.mxu0 0
  %67 = vmatprep.subr.bf16.mxu0 0
  %68 = vmatpush1.bf16.msra.mxu0 0
  %69 = vmatprep.subr.bf16.mxu0 0
  %70 = vmatpush1.bf16.msra.mxu0 0
  %71 = vmatprep.subr.bf16.mxu0 0
  %72 = vmatpush1.bf16.msra.mxu0 0
  %73 = vmatprep.subr.bf16.mxu0 0
  %74 = vmatpush1.bf16.msra.mxu0 0
  %75 = vmatprep.subr.bf16.mxu0 0
  %76 = vmatpush1.bf16.msra.mxu0 0
  %77 = vmatprep.subr.bf16.mxu0 0
  %78 = vmatpush1.bf16.msra.mxu0 0
  %79 = vmatprep.subr.bf16.mxu0 0
  %80 = vmatpush1.bf16.msra.mxu0 0
  %81 = vmatprep.subr.bf16.mxu0 0
  %82 = vmatpush1.bf16.msra.mxu0 0
  %83 = vmatprep.subr.bf16.mxu0 0
  %84 = vmatpush1.bf16.msra.mxu0 0
  %85 = vmatprep.mubr.bf16.mxu0 0
  %86 = vmatmul.mubr.bf16.gmra.mrb[0].mxu0 %v47
  %v87 = vpop.f32.mrb[0].mxu0
  %v88 = vadd.f32 0.0, %v87
  %v89 = vpop.f32.mrb[0].mxu0
  %v90 = vpop.f32.mrb[0].mxu0
  %v91 = vpop.f32.mrb[0].mxu0
  %92 = vdwg.mxu0
  %v93 = vadd.f32 %v42, %v88
  %vm94 = vcmask 261120
  %95 = vst.msk [vmem:[#allocation2] sm:$0xff] %vm94, %v93
  // Predicated region
  $region46: #{gcn_reg_forward.7} parent=0 // pred_check
    %p96 = pneg %p36
  $region47: #{gcn_reg_forward.7} parent=0 // pred_check_branch
    %98 = sbr.rel (%p96) target = $region49
  $region48: #{gcn_reg_forward.7} parent=0 // pred_region
    %v99 = vld [vmem:[#allocation2] sm:$0xff]
    %v100 = vpack.c.bf16 %v99, %v99
    %v101 = vld [vmem:[%s2] sm:$0xf]
    %v102 = vld [vmem:[%s2 + $0x4] sm:$0xf]
    %v103 = vld [vmem:[%s2 + $0x8] sm:$0xf]
    %v104 = vld [vmem:[%s2 + $0xc] sm:$0xf]
    %v105 = vld [vmem:[%s3] sm:$0x1]
    %v107 = vlaneseq
    %v108 = vshrl.u32 %v107, 7
    %v109 = vsub.s32 0, %v108
    %v110 = vrot.slane %v105, %v109
    %v116 = vunpack.c.l.b16 %v101
    %v117 = vunpack.c.l.b16 %v102
    %v118 = vunpack.c.l.b16 %v103
    %v119 = vunpack.c.l.b16 %v104
    %v120 = vpack.c.b16 %v117, %v116
    %v121 = vpack.c.b16 %v119, %v118
    %v125 = vsel %vm94, %v100, 0
    %127 = vmatprep.subr.bf16.mxu0 0
    %128 = vmatpush1.bf16.msra.mxu0 %v120
    %129 = vmatprep.subr.bf16.mxu0 0
    %130 = vmatpush1.bf16.msra.mxu0 %v121
    %131 = vmatprep.subr.bf16.mxu0 0
    %132 = vmatpush1.bf16.msra.mxu0 0
    %133 = vmatprep.subr.bf16.mxu0 0
    %134 = vmatpush1.bf16.msra.mxu0 0
    %135 = vmatprep.subr.bf16.mxu0 0
    %136 = vmatpush1.bf16.msra.mxu0 0
    %137 = vmatprep.subr.bf16.mxu0 0
    %138 = vmatpush1.bf16.msra.mxu0 0
    %139 = vmatprep.subr.bf16.mxu0 0
    %140 = vmatpush1.bf16.msra.mxu0 0
    %141 = vmatprep.subr.bf16.mxu0 0
    %142 = vmatpush1.bf16.msra.mxu0 0
    %143 = vmatprep.subr.bf16.mxu0 0
    %144 = vmatpush1.bf16.msra.mxu0 0
    %145 = vmatprep.subr.bf16.mxu0 0
    %146 = vmatpush1.bf16.msra.mxu0 0
    %147 = vmatprep.subr.bf16.mxu0 0
    %148 = vmatpush1.bf16.msra.mxu0 0
    %149 = vmatprep.subr.bf16.mxu0 0
    %150 = vmatpush1.bf16.msra.mxu0 0
    %151 = vmatprep.subr.bf16.mxu0 0
    %152 = vmatpush1.bf16.msra.mxu0 0
    %153 = vmatprep.subr.bf16.mxu0 0
    %154 = vmatpush1.bf16.msra.mxu0 0
    %155 = vmatprep.subr.bf16.mxu0 0
    %156 = vmatpush1.bf16.msra.mxu0 0
    %157 = vmatprep.subr.bf16.mxu0 0
    %158 = vmatpush1.bf16.msra.mxu0 0
    %159 = vmatprep.mubr.bf16.mxu0 0
    %160 = vmatmul.mubr.bf16.gmra.mrb[0].mxu0 %v125
    %v161 = vpop.f32.mrb[0].mxu0
    %v162 = vadd.f32 %v110, %v161
    %v163 = vpop.f32.mrb[0].mxu0
    %v164 = vpop.f32.mrb[0].mxu0
    %v165 = vpop.f32.mrb[0].mxu0
    %166 = vdwg.mxu0
    %v167 = vmax.f32 %v162, 0.0
    %v168 = vpack.c.bf16 %v167, %v167
    %v169 = vld [vmem:[%s4] sm:$0xf]
    %v170 = vld [vmem:[%s4 + $0x4] sm:$0xf]
    %v171 = vld [vmem:[%s4 + $0x8] sm:$0xf]
    %v172 = vld [vmem:[%s4 + $0xc] sm:$0xf]
    %v173 = vld [vmem:[%s5] sm:$0x1]
    %v175 = vlaneseq
    %v176 = vshrl.u32 %v175, 7
    %v177 = vsub.s32 0, %v176
    %v178 = vrot.slane %v173, %v177
    %v184 = vunpack.c.l.b16 %v169
    %v185 = vunpack.c.l.b16 %v170
    %v186 = vunpack.c.l.b16 %v171
    %v187 = vunpack.c.l.b16 %v172
    %v188 = vpack.c.b16 %v185, %v184
    %v189 = vpack.c.b16 %v187, %v186
    %v193 = vsel %vm94, %v168, 0
    %195 = vmatprep.subr.bf16.mxu0 0
    %196 = vmatpush1.bf16.msra.mxu0 %v188
    %197 = vmatprep.subr.bf16.mxu0 0
    %198 = vmatpush1.bf16.msra.mxu0 %v189
    %199 = vmatprep.subr.bf16.mxu0 0
    %200 = vmatpush1.bf16.msra.mxu0 0
    %201 = vmatprep.subr.bf16.mxu0 0
    %202 = vmatpush1.bf16.msra.mxu0 0
    %203 = vmatprep.subr.bf16.mxu0 0
    %204 = vmatpush1.bf16.msra.mxu0 0
    %205 = vmatprep.subr.bf16.mxu0 0
    %206 = vmatpush1.bf16.msra.mxu0 0
    %207 = vmatprep.subr.bf16.mxu0 0
    %208 = vmatpush1.bf16.msra.mxu0 0
    %209 = vmatprep.subr.bf16.mxu0 0
    %210 = vmatpush1.bf16.msra.mxu0 0
    %211 = vmatprep.subr.bf16.mxu0 0
    %212 = vmatpush1.bf16.msra.mxu0 0
    %213 = vmatprep.subr.bf16.mxu0 0
    %214 = vmatpush1.bf16.msra.mxu0 0
    %215 = vmatprep.subr.bf16.mxu0 0
    %216 = vmatpush1.bf16.msra.mxu0 0
    %217 = vmatprep.subr.bf16.mxu0 0
    %218 = vmatpush1.bf16.msra.mxu0 0
    %219 = vmatprep.subr.bf16.mxu0 0
    %220 = vmatpush1.bf16.msra.mxu0 0
    %221 = vmatprep.subr.bf16.mxu0 0
    %222 = vmatpush1.bf16.msra.mxu0 0
    %223 = vmatprep.subr.bf16.mxu0 0
    %224 = vmatpush1.bf16.msra.mxu0 0
    %225 = vmatprep.subr.bf16.mxu0 0
    %226 = vmatpush1.bf16.msra.mxu0 0
    %227 = vmatprep.mubr.bf16.mxu0 0
    %228 = vmatmul.mubr.bf16.gmra.mrb[0].mxu0 %v193
    %v229 = vpop.f32.mrb[0].mxu0
    %v230 = vadd.f32 %v178, %v229
    %v231 = vpop.f32.mrb[0].mxu0
    %v232 = vpop.f32.mrb[0].mxu0
    %v233 = vpop.f32.mrb[0].mxu0
    %234 = vdwg.mxu0
    %v235 = vmax.f32 %v230, 0.0
    %v236 = vpack.c.bf16 %v235, %v235
    %v237 = vld [vmem:[%s6] sm:$0xf]
    %v238 = vld [vmem:[%s6 + $0x4] sm:$0xf]
    %v239 = vld [vmem:[%s6 + $0x8] sm:$0xf]
    %v240 = vld [vmem:[%s6 + $0xc] sm:$0xf]
    %v241 = vld [vmem:[%s7] sm:$0x1]
    %v243 = vlaneseq
    %v244 = vshrl.u32 %v243, 7
    %v245 = vsub.s32 0, %v244
    %v246 = vrot.slane %v241, %v245
    %v252 = vunpack.c.l.b16 %v237
    %v253 = vunpack.c.l.b16 %v238
    %v254 = vunpack.c.l.b16 %v239
    %v255 = vunpack.c.l.b16 %v240
    %v256 = vpack.c.b16 %v253, %v252
    %v257 = vpack.c.b16 %v255, %v254
    %v261 = vsel %vm94, %v236, 0
    %263 = vmatprep.subr.bf16.mxu0 0
    %264 = vmatpush1.bf16.msra.mxu0 %v256
    %265 = vmatprep.subr.bf16.mxu0 0
    %266 = vmatpush1.bf16.msra.mxu0 %v257
    %267 = vmatprep.subr.bf16.mxu0 0
    %268 = vmatpush1.bf16.msra.mxu0 0
    %269 = vmatprep.subr.bf16.mxu0 0
    %270 = vmatpush1.bf16.msra.mxu0 0
    %271 = vmatprep.subr.bf16.mxu0 0
    %272 = vmatpush1.bf16.msra.mxu0 0
    %273 = vmatprep.subr.bf16.mxu0 0
    %274 = vmatpush1.bf16.msra.mxu0 0
    %275 = vmatprep.subr.bf16.mxu0 0
    %276 = vmatpush1.bf16.msra.mxu0 0
    %277 = vmatprep.subr.bf16.mxu0 0
    %278 = vmatpush1.bf16.msra.mxu0 0
    %279 = vmatprep.subr.bf16.mxu0 0
    %280 = vmatpush1.bf16.msra.mxu0 0
    %281 = vmatprep.subr.bf16.mxu0 0
    %282 = vmatpush1.bf16.msra.mxu0 0
    %283 = vmatprep.subr.bf16.mxu0 0
    %284 = vmatpush1.bf16.msra.mxu0 0
    %285 = vmatprep.subr.bf16.mxu0 0
    %286 = vmatpush1.bf16.msra.mxu0 0
    %287 = vmatprep.subr.bf16.mxu0 0
    %288 = vmatpush1.bf16.msra.mxu0 0
    %289 = vmatprep.subr.bf16.mxu0 0
    %290 = vmatpush1.bf16.msra.mxu0 0
    %291 = vmatprep.subr.bf16.mxu0 0
    %292 = vmatpush1.bf16.msra.mxu0 0
    %293 = vmatprep.subr.bf16.mxu0 0
    %294 = vmatpush1.bf16.msra.mxu0 0
    %295 = vmatprep.mubr.bf16.mxu0 0
    %296 = vmatmul.mubr.bf16.gmra.mrb[0].mxu0 %v261
    %v297 = vpop.f32.mrb[0].mxu0
    %v298 = vadd.f32 %v246, %v297
    %v299 = vpop.f32.mrb[0].mxu0
    %v300 = vpop.f32.mrb[0].mxu0
    %v301 = vpop.f32.mrb[0].mxu0
    %302 = vdwg.mxu0
    %v303 = vmax.f32 %v298, 0.0
    %v304 = vpack.c.bf16 %v303, %v303
    %v305 = vld [vmem:[%s8] sm:$0xf]
    %v306 = vld [vmem:[%s8 + $0x4] sm:$0xf]
    %v307 = vld [vmem:[%s9] sm:$0x1]
    %v309 = vlaneseq
    %v310 = vshrl.u32 %v309, 7
    %v311 = vsub.s32 0, %v310
    %v312 = vrot.slane %v307, %v311
    %v316 = vunpack.c.l.b16 %v305
    %v317 = vunpack.c.l.b16 %v306
    %v318 = vpack.c.b16 %v317, %v316
    %vm320 = vcmask 130048
    %v322 = vsel %vm320, %v304, 0
    %324 = vmatprep.subr.bf16.mxu0 0
    %325 = vmatpush1.bf16.msra.mxu0 %v318
    %326 = vmatprep.subr.bf16.mxu0 0
    %327 = vmatpush1.bf16.msra.mxu0 0
    %328 = vmatprep.subr.bf16.mxu0 0
    %329 = vmatpush1.bf16.msra.mxu0 0
    %330 = vmatprep.subr.bf16.mxu0 0
    %331 = vmatpush1.bf16.msra.mxu0 0
    %332 = vmatprep.subr.bf16.mxu0 0
    %333 = vmatpush1.bf16.msra.mxu0 0
    %334 = vmatprep.subr.bf16.mxu0 0
    %335 = vmatpush1.bf16.msra.mxu0 0
    %336 = vmatprep.subr.bf16.mxu0 0
    %337 = vmatpush1.bf16.msra.mxu0 0
    %338 = vmatprep.subr.bf16.mxu0 0
    %339 = vmatpush1.bf16.msra.mxu0 0
    %340 = vmatprep.subr.bf16.mxu0 0
    %341 = vmatpush1.bf16.msra.mxu0 0
    %342 = vmatprep.subr.bf16.mxu0 0
    %343 = vmatpush1.bf16.msra.mxu0 0
    %344 = vmatprep.subr.bf16.mxu0 0
    %345 = vmatpush1.bf16.msra.mxu0 0
    %346 = vmatprep.subr.bf16.mxu0 0
    %347 = vmatpush1.bf16.msra.mxu0 0
    %348 = vmatprep.subr.bf16.mxu0 0
    %349 = vmatpush1.bf16.msra.mxu0 0
    %350 = vmatprep.subr.bf16.mxu0 0
    %351 = vmatpush1.bf16.msra.mxu0 0
    %352 = vmatprep.subr.bf16.mxu0 0
    %353 = vmatpush1.bf16.msra.mxu0 0
    %354 = vmatprep.subr.bf16.mxu0 0
    %355 = vmatpush1.bf16.msra.mxu0 0
    %356 = vmatprep.mubr.bf16.mxu0 0
    %357 = vmatmul.mubr.bf16.gmra.mrb[0].mxu0 %v322
    %v358 = vpop.f32.mrb[0].mxu0
    %v359 = vadd.f32 %v312, %v358
    %v360 = vpop.f32.mrb[0].mxu0
    %v361 = vpop.f32.mrb[0].mxu0
    %v362 = vpop.f32.mrb[0].mxu0
    %363 = vdwg.mxu0
    %v364 = vtanh.pop %v359
    %365 = vst [vmem:[%s10] sm:$0xff] %v364
  $region49: #{gcn_reg_forward.7} parent=0 // pred_fallthru
    _
  // Predicated region
  $region50: #{gcn_reg_forward.7} parent=0 // pred_check
    _
  $region51: #{gcn_reg_forward.7} parent=0 // pred_check_branch
    %367 = sbr.rel (0) target = $region53
  $region52: #{gcn_reg_forward.7} parent=0 // pred_region
    _
  $region53: #{gcn_reg_forward.7} parent=0 // pred_fallthru
    _
  // Predicated region
  $region54: #{gcn_reg_forward.7} parent=0 // pred_check
    _
  $region55: #{gcn_reg_forward.7} parent=0 // pred_check_branch
    %369 = sbr.rel (0) target = $region57
  $region56: #{gcn_reg_forward.7} parent=0 // pred_region
    _
  $region57: #{gcn_reg_forward.7} parent=0 // pred_fallthru
    _

</llo_original>
